<compile_context>
chip_gen: v5e
topology: v5e:2x2
jax: 0.10.0
libtpu: 0.0.40
codegen_flags: <defaults>
</compile_context>

<pallas_src>
import jax
import jax.numpy as jnp
from jax.experimental import pallas as pl
from jax.experimental.pallas import tpu as pltpu


def _round_up(n, m):
    return ((n + m - 1) // m) * m


def _head_kernel(x_ref, w_ref, b_ref, o_ref):
    x = jnp.maximum(x_ref[...], 0.0)                                   # ReLU (VPU)
    logits = jnp.dot(x, w_ref[...], preferred_element_type=jnp.float32)  # MXU
    logits = logits + b_ref[...]                                       # (TB, C_pad) + (1, C_pad)
    o_ref[...] = jax.nn.sigmoid(logits).astype(o_ref.dtype)            # EUP


def classification_head(x, w, b, *, tb_max=1024):
    """x: (B, D) f32, w: (D, C) f32, b: (C,) f32 -> (B, C) f32 = sigmoid(relu(x) @ w + b)."""
    B, D = x.shape
    C = w.shape[1]

    # Lane-dense output: pad the class dim to a multiple of 128 (zeros in W/b, sliced off later).
    C_pad = _round_up(max(C, 128), 128)

    # Batch tile: multiple of 8 (sublane), sized so double-buffered x + out tiles stay well
    # inside the smallest scoped-VMEM default (v5e: 16 MiB), capped at the (padded) batch.
    bytes_per_row = (D + C_pad) * 4                      # f32 x row + f32 out row
    budget = 8 * 1024 * 1024                             # ~8 MiB live -> ~16 MiB with double-buffering
    tb = min(tb_max, max(8, budget // (2 * bytes_per_row)))
    tb = min(tb, _round_up(B, 8))
    tb = max(8, (tb // 8) * 8)
    B_pad = _round_up(B, tb)

    # Zero-pad inputs; padded rows/cols are sliced off after the call.
    x_p = x if B_pad == B else jnp.pad(x, ((0, B_pad - B), (0, 0)))
    w_p = jnp.pad(w, ((0, 0), (0, C_pad - C)))
    b_p = jnp.pad(b, (0, C_pad - C)).reshape(1, C_pad)

    out = pl.pallas_call(
        _head_kernel,
        out_shape=jax.ShapeDtypeStruct((B_pad, C_pad), x.dtype),
        grid=(B_pad // tb,),
        in_specs=[
            pl.BlockSpec((tb, D), lambda i: (i, 0)),       # streamed batch tiles (pipelined)
            pl.BlockSpec((D, C_pad), lambda i: (0, 0)),    # weights: resident (constant block)
            pl.BlockSpec((1, C_pad), lambda i: (0, 0)),    # bias: resident (constant block)
        ],
        out_specs=pl.BlockSpec((tb, C_pad), lambda i: (i, 0)),
        compiler_params=pltpu.CompilerParams(
            dimension_semantics=("parallel",),             # independent batch tiles -> v7x dual-TC
        ),
    )(x_p, w_p, b_p)

    return out[:B, :C]


if __name__ == "__main__":
    # Small, deterministic example consistent with the module: input_size=32, num_classes=10.
    B, D, C = 8, 32, 10
    key = jax.random.PRNGKey(0)
    kx, kw, kb = jax.random.split(key, 3)

    x = jax.random.normal(kx, (B, D), dtype=jnp.float32)
    # Per-class Linear(input_size, 1) weights, stacked: (D, C); biases: (C,).
    bound = 1.0 / jnp.sqrt(D)
    w = jax.random.uniform(kw, (D, C), dtype=jnp.float32, minval=-bound, maxval=bound)
    b = jax.random.uniform(kb, (C,), dtype=jnp.float32, minval=-bound, maxval=bound)

    out = classification_head(x, w, b)
    out = jax.block_until_ready(out)

    # Reference check in plain JAX.
    ref = jax.nn.sigmoid(jnp.maximum(x, 0.0) @ w + b[None, :])
    assert out.shape == (B, C)
    assert jnp.allclose(out, ref, atol=1e-5, rtol=1e-5)

    print("KERNEL_OK")
</pallas_src>

<mosaic_0001>
module attributes {stable_mosaic.version = 11 : i64} {
  func.func @_head_kernel(%arg0: i32, %arg1: memref<8x32xf32, #tpu.memory_space<vmem>>, %arg2: memref<32x128xf32, #tpu.memory_space<vmem>>, %arg3: memref<1x128xf32, #tpu.memory_space<vmem>>, %arg4: memref<8x128xf32, #tpu.memory_space<vmem>>) attributes {dimension_semantics = [#tpu.dimension_semantics<parallel>], iteration_bounds = array<i64: 1>, scalar_prefetch = 0 : i64, scratch_operands = 0 : i64, tpu.core_type = #tpu.core_type<tc>, window_params = [{transform_indices = @transform_0, window_bounds = array<i64: 8, 32>}, {pipeline_mode = #tpu.pipeline_mode<synchronous>, transform_indices = @transform_1, window_bounds = array<i64: 32, 128>}, {pipeline_mode = #tpu.pipeline_mode<synchronous>, transform_indices = @transform_2, window_bounds = array<i64: 1, 128>}, {transform_indices = @transform_3, window_bounds = array<i64: 8, 128>}]} {
    %c0 = arith.constant 0 : index
    %c0_0 = arith.constant 0 : index
    %0 = vector.load %arg1[%c0, %c0_0] : memref<8x32xf32, #tpu.memory_space<vmem>>, vector<8x32xf32>
    %cst = arith.constant 0.000000e+00 : f32
    %1 = vector.broadcast %cst : f32 to vector<8x32xf32>
    %2 = arith.maximumf %0, %1 : vector<8x32xf32>
    %c0_1 = arith.constant 0 : index
    %c0_2 = arith.constant 0 : index
    %3 = vector.load %arg2[%c0_1, %c0_2] : memref<32x128xf32, #tpu.memory_space<vmem>>, vector<32x128xf32>
    %cst_3 = arith.constant dense<0.000000e+00> : vector<8x128xf32>
    %4 = tpu.matmul %2, %3, %cst_3 {dimension_numbers = #tpu.dot_dimension_numbers<[1], [0], [0], [1], [0, 0, 1, 1], [], []>} : vector<8x32xf32>, vector<32x128xf32>, vector<8x128xf32> -> vector<8x128xf32>
    %c0_4 = arith.constant 0 : index
    %c0_5 = arith.constant 0 : index
    %5 = vector.load %arg3[%c0_4, %c0_5] : memref<1x128xf32, #tpu.memory_space<vmem>>, vector<1x128xf32>
    %6 = vector.broadcast %5 : vector<1x128xf32> to vector<8x128xf32>
    %7 = arith.addf %4, %6 : vector<8x128xf32>
    %8 = arith.negf %7 : vector<8x128xf32>
    %9 = math.exp %8 : vector<8x128xf32>
    %cst_6 = arith.constant 1.000000e+00 : f32
    %10 = vector.broadcast %cst_6 : f32 to vector<8x128xf32>
    %11 = arith.addf %10, %9 : vector<8x128xf32>
    %12 = arith.divf %10, %11 : vector<8x128xf32>
    %c0_7 = arith.constant 0 : index
    %c0_8 = arith.constant 0 : index
    %13 = vector.load %arg4[%c0_7, %c0_8] : memref<8x128xf32, #tpu.memory_space<vmem>>, vector<8x128xf32>
    tpu.vector_store %arg4[%c0_7, %c0_8], %12 {strides = array<i32>} : memref<8x128xf32, #tpu.memory_space<vmem>>, vector<8x128xf32>,
    return
  }
  func.func @transform_0(%arg0: i32) -> (i32, i32) {
    %c0_i32 = arith.constant 0 : i32
    %c0_i32_0 = arith.constant 0 : i32
    return %arg0, %c0_i32 : i32, i32
  }
  func.func @transform_1(%arg0: i32) -> (i32, i32) {
    %c0_i32 = arith.constant 0 : i32
    %c0_i32_0 = arith.constant 0 : i32
    %c0_i32_1 = arith.constant 0 : i32
    return %c0_i32, %c0_i32_0 : i32, i32
  }
  func.func @transform_2(%arg0: i32) -> (i32, i32) {
    %c0_i32 = arith.constant 0 : i32
    %c0_i32_0 = arith.constant 0 : i32
    %c0_i32_1 = arith.constant 0 : i32
    return %c0_i32, %c0_i32_0 : i32, i32
  }
  func.func @transform_3(%arg0: i32) -> (i32, i32) {
    %c0_i32 = arith.constant 0 : i32
    %c0_i32_0 = arith.constant 0 : i32
    return %arg0, %c0_i32 : i32, i32
  }
}

</mosaic_0001>

<llo_original>
// kernel: tpu_custom_call.1
$region0: #{tpu_custom_call.1}
  #allocation0 [shape = 'u32[]', space=smem, size = 0x4, offset = 0x4, fixed_abs, tag = 'smem constant byte address 0x4 - core index']
  #allocation1 [shape = 'u32[72,128]{1,0:T(1,128)}', space=vmem, size = 0x9000, scoped, tag = 'internal scratch']
  %s0 = inlined_call_operand.hbm [shape: f32[8,32], index: 0, kind: input, shape index: {}]
  %s1 = inlined_call_operand.hbm [shape: f32[32,128], index: 1, kind: input, shape index: {}]
  %s2 = inlined_call_operand.vmem [shape: f32[1,128], index: 2, kind: input, shape index: {}]
  %s3 = inlined_call_operand.hbm [shape: f32[8,128], index: 3, kind: output, shape index: {}]
  %s4 = sld [smem:[#allocation0]]
  $region30: #{tpu_custom_call.1} parent=0
    _
  %s6 = ssub.s32 1, %s4
  %s7 = scalar_select 0, %s6, %s4
  $region1: #{tpu_custom_call.1} parent=0
    #allocation2 [shape = 'u8[4096]{0}', space=vmem, size = 0x1000, scoped, tag = 'input window, operand 0, single buffered']
    #allocation3 [shape = 's32[1]{0}', space=sflag, size = 0x4, scoped, tag = 'scoped memory for tpu_custom_call.1']
    #allocation4 [shape = 's32[1]{0}', space=sflag, size = 0x4, scoped, tag = 'scoped memory for tpu_custom_call.1']
    #allocation5 [shape = 'u8[16384]{0}', space=vmem, size = 0x4000, scoped, tag = 'input window, operand 1, single buffered']
    #allocation6 [shape = 's32[1]{0}', space=sflag, size = 0x4, scoped, tag = 'scoped memory for tpu_custom_call.1']
    #allocation7 [shape = 'u8[4096]{0}', space=vmem, size = 0x1000, scoped, tag = 'output window, operand 0, single buffered']
    %8 = vsyncpa [#allocation3], 0
    %9 = vsyncpa [#allocation6], 0
    %10 = vsyncpa [#allocation4], 0
    // Predicated region
    $region2: #{tpu_custom_call.1} parent=1 // pred_check
      _
    $region3: #{tpu_custom_call.1} parent=1 // pred_check_branch
      %12 = sbr.rel (0) target = $region5
    $region4: #{tpu_custom_call.1} parent=1 // pred_region
      %14 = vsyncadd [#allocation3], 0
      %s16 = sshll.u32 %s0, 4
      %s17 = int_to_ptr.hbm [resolvable:$true] %s16
      %s18 = sshll.u32 [#allocation2], 4
      %s19 = int_to_ptr.vmem [resolvable:$true] %s18
      %21 = dma.hbm_to_vmem [thread:$0]  %s17, 128, %s19, [#allocation3]
    $region5: #{tpu_custom_call.1} parent=1 // pred_fallthru
      _
    // Predicated region
    $region6: #{tpu_custom_call.1} parent=1 // pred_check
      _
    $region7: #{tpu_custom_call.1} parent=1 // pred_check_branch
      %23 = sbr.rel (0) target = $region9
    $region8: #{tpu_custom_call.1} parent=1 // pred_region
      %25 = vsyncadd [#allocation6], 0
      %s26 = sshll.u32 %s1, 4
      %s27 = int_to_ptr.hbm [resolvable:$true] %s26
      %s28 = sshll.u32 [#allocation5], 4
      %s29 = int_to_ptr.vmem [resolvable:$true] %s28
      %34 = dma.hbm_to_vmem [thread:$0]  %s27, 512, %s29, [#allocation6], 128, 128, 8
    $region9: #{tpu_custom_call.1} parent=1 // pred_fallthru
      _
    // Predicated region
    $region10: #{tpu_custom_call.1} parent=1 // pred_check
      _
    $region11: #{tpu_custom_call.1} parent=1 // pred_check_branch
      %36 = sbr.rel (0) target = $region13
    $region12: #{tpu_custom_call.1} parent=1 // pred_region
      _
    $region13: #{tpu_custom_call.1} parent=1 // pred_fallthru
      _
    // Predicated region
    $region14: #{tpu_custom_call.1} parent=1 // pred_check
      _
    $region15: #{tpu_custom_call.1} parent=1 // pred_check_branch
      %38 = sbr.rel (0) target = $region17
    $region16: #{tpu_custom_call.1} parent=1 // pred_region
      %40 = dma.done [#allocation3], 128
    $region17: #{tpu_custom_call.1} parent=1 // pred_fallthru
      _
    // Predicated region
    $region18: #{tpu_custom_call.1} parent=1 // pred_check
      _
    $region19: #{tpu_custom_call.1} parent=1 // pred_check_branch
      %42 = sbr.rel (0) target = $region21
    $region20: #{tpu_custom_call.1} parent=1 // pred_region
      %44 = dma.done [#allocation6], 512
    $region21: #{tpu_custom_call.1} parent=1 // pred_fallthru
      _
    %v45 = vld [vmem:[#allocation2] sm:$0xff]
    %v46 = vmax.f32 %v45, 0.0
    %v47 = vld [vmem:[#allocation5] sm:$0xff]
    %v48 = vld [vmem:[#allocation5 + $0x8] sm:$0xff]
    %v49 = vld [vmem:[#allocation5 + $0x10] sm:$0xff]
    %v50 = vld [vmem:[#allocation5 + $0x18] sm:$0xff]
    %v51 = vld [vmem:[%s2] sm:$0x1]
    %v53 = vperm.slane %v51, 0
    %vm55 = vcmask 261120
    %v57 = vsel %vm55, %v46, 0
    %59 = vmatpush.msra.mxu0 0.0
    %60 = vmatpush.msra.mxu0 0.0
    %61 = vmatpush.msra.mxu0 0.0
    %62 = vmatpush.msra.mxu0 0.0
    %63 = vmatpush.msra.mxu0 0.0
    %64 = vmatpush.msra.mxu0 0.0
    %65 = vmatpush.msra.mxu0 0.0
    %66 = vmatpush.msra.mxu0 0.0
    %67 = vmatpush.msra.mxu0 0.0
    %68 = vmatpush.msra.mxu0 0.0
    %69 = vmatpush.msra.mxu0 0.0
    %70 = vmatpush.msra.mxu0 0.0
    %71 = vmatpush.msra.mxu0 %v50
    %72 = vmatpush.msra.mxu0 %v49
    %73 = vmatpush.msra.mxu0 %v48
    %74 = vmatpush.msra.mxu0 %v47
    %75 = vmatmul.f32.gmra.mxu0 %v57
    %v76 = vpop.f32.mrf.mxu0
    %v77 = vadd.f32 %v53, %v76
    %78 = vdwg.mxu0
    %v79 = vxor.u32 %v77, 2147483648
    %v80 = vmul.f32 %v79, 1.442695
    %v81 = vpow.pop %v80
    %v82 = vadd.f32 %v81, 1.0
    %v83 = vrcp.pop %v82
    %v84 = vmul.f32 %v82, %v83
    %v85 = vsub.f32 1.0, %v84
    %v86 = vmul.f32 %v83, %v85
    %v87 = vadd.f32 %v83, %v86
    %vm88 = vweird.f32 %v82
    %vm89 = vweird.f32 %v83
    %vm90 = vmor %vm88, %vm89
    %v91 = vsel %vm90, %v83, %v87
    %v92 = vand.u32 2147483647, %v82
    %vm93 = vcmp.eq.f32.partialorder %v92, 8.507059e+37
    %v94 = vand.u32 %v82, 2147483648
    %v95 = vor.u32 1.1754944e-38, %v94
    %v96 = vsel %vm93, %v95, %v91
    %v97 = vmul.f32 1.0, %v96
    %98 = vst [vmem:[#allocation7] sm:$0xff] %v97
    // Predicated region
    $region22: #{tpu_custom_call.1} parent=1 // pred_check
      _
    $region23: #{tpu_custom_call.1} parent=1 // pred_check_branch
      %100 = sbr.rel (0) target = $region25
    $region24: #{tpu_custom_call.1} parent=1 // pred_region
      %102 = vsyncadd [#allocation4], 0
      %s104 = sshll.u32 [#allocation7], 4
      %s105 = int_to_ptr.vmem [resolvable:$true] %s104
      %s106 = sshll.u32 %s3, 4
      %s107 = int_to_ptr.hbm [resolvable:$true] %s106
      %109 = dma.vmem_to_hbm [thread:$0]  %s105, 128, %s107, [#allocation4]
    $region25: #{tpu_custom_call.1} parent=1 // pred_fallthru
      _
    // Predicated region
    $region26: #{tpu_custom_call.1} parent=1 // pred_check
      _
    $region27: #{tpu_custom_call.1} parent=1 // pred_check_branch
      %111 = sbr.rel (0) target = $region29
    $region28: #{tpu_custom_call.1} parent=1 // pred_region
      %113 = dma.done [#allocation4], 128
    $region29: #{tpu_custom_call.1} parent=1 // pred_fallthru
      _
    %114 = vsyncpa [#allocation3], 1
    %115 = vsyncpa [#allocation6], 1
    %116 = vsyncpa [#allocation4], 1

</llo_original>
